<compile_context>
chip_gen: v5e
topology: v5e:2x2
jax: 0.10.0
libtpu: 0.0.40
codegen_flags: <defaults>
</compile_context>

<pallas_src>
import functools

import jax
import jax.numpy as jnp
from jax.experimental import pallas as pl
from jax.experimental.pallas import tpu as pltpu


# ---------------------------------------------------------------------------
# Fused kernel: QKV projection + multi-head attention + output projection.
# One grid step == one batch element.
# ---------------------------------------------------------------------------
def _fused_attention_kernel(x_ref, w_qkv_ref, w_proj_ref, b_proj_ref, o_ref,
                            qkv_ref, heads_ref, *, num_heads):
    _, N, C = x_ref.shape
    Dh = C // num_heads

    # QKV projection. Scale already folded into the Q columns of w_qkv (bf16),
    # qkv_bias=False -> no bias add and no in-kernel score scaling.
    x = x_ref[0].astype(jnp.bfloat16)                                      # (N, C)
    qkv = jnp.dot(x, w_qkv_ref[...], preferred_element_type=jnp.float32)   # (N, 3C) f32
    # Park qkv in VMEM scratch (bf16): keeps it out of vregs across the head
    # loop and feeds the per-head MXU ops with bf16 operands directly.
    qkv_ref[...] = qkv.astype(jnp.bfloat16)

    # Per-head attention. Static unroll (H is small). Each head's output is
    # written into its lane slab of `heads_ref`, so the output projection is a
    # single K=C matmul after the loop instead of H rank-Dh accumulator updates.
    # TODO(synk): for large N, add a query-tile grid axis (+ online softmax over
    #             KV tiles) instead of materializing the full (N, N) score.
    # TODO(synk): for Dh=64 configs, reorder W_qkv columns so each head slab is
    #             128-lane aligned (odd-head slices are masked copies otherwise).
    for h in range(num_heads):
        lo = h * Dh
        qh = qkv_ref[:, lo:lo + Dh]                      # (N, Dh) bf16
        kh = qkv_ref[:, C + lo:C + lo + Dh]
        vh = qkv_ref[:, 2 * C + lo:2 * C + lo + Dh]

        # scores: contract last axes of q and k -> no explicit k.T / XLU transpose.
        s = jax.lax.dot_general(qh, kh, (((1,), (1,)), ((), ())),
                                preferred_element_type=jnp.float32)        # (N, N) f32
        s = s - jnp.max(s, axis=-1, keepdims=True)       # softmax math stays f32
        p = jnp.exp(s)
        inv_l = pl.reciprocal(jnp.sum(p, axis=-1, keepdims=True), approx=True)
        oh = jnp.dot(p.astype(jnp.bfloat16), vh,
                     preferred_element_type=jnp.float32) * inv_l           # (N, Dh)
        heads_ref[:, lo:lo + Dh] = oh.astype(jnp.bfloat16)

    # Single (N, C) @ (C, C) projection: full MXU contraction depth, one pass.
    out = jnp.dot(heads_ref[...], w_proj_ref[...],
                  preferred_element_type=jnp.float32)                      # (N, C) f32
    o_ref[0] = (out + b_proj_ref[...]).astype(o_ref.dtype)


def attention_forward(x, w_qkv_scaled_bf16, w_proj_bf16, b_proj, num_heads,
                      *, vmem_limit_bytes=48 * 1024 * 1024):
    B, N, C = x.shape
    kernel = functools.partial(_fused_attention_kernel, num_heads=num_heads)
    # Weights have constant index maps -> single-buffer them (reclaims the
    # useless second pipeline buffer; matters for v7x 64 MiB / v5e 16 MiB default).
    resident = pl.Buffered(1)
    return pl.pallas_call(
        kernel,
        out_shape=jax.ShapeDtypeStruct((B, N, C), x.dtype),
        grid_spec=pltpu.PrefetchScalarGridSpec(
            num_scalar_prefetch=0,
            grid=(B,),
            in_specs=[
                pl.BlockSpec((1, N, C), lambda b: (b, 0, 0)),        # x (per batch)
                pl.BlockSpec((C, 3 * C), lambda b: (0, 0),
                             pipeline_mode=resident),                # W_qkv (resident)
                pl.BlockSpec((C, C), lambda b: (0, 0),
                             pipeline_mode=resident),                # W_proj (resident)
                pl.BlockSpec((1, C), lambda b: (0, 0),
                             pipeline_mode=resident),                # b_proj (resident)
            ],
            out_specs=pl.BlockSpec((1, N, C), lambda b: (b, 0, 0)),
            scratch_shapes=[
                pltpu.VMEM((N, 3 * C), jnp.bfloat16),   # qkv parked out of vregs
                pltpu.VMEM((N, C), jnp.bfloat16),       # concatenated head outputs
            ],
        ),
        compiler_params=pltpu.CompilerParams(
            dimension_semantics=("parallel",),          # batch axis -> megacore / 2 TCs
            vmem_limit_bytes=vmem_limit_bytes,          # > v5e 16 MiB default, < v7x 64 MiB
        ),
    )(x, w_qkv_scaled_bf16, w_proj_bf16, b_proj.reshape(1, C))


# ---------------------------------------------------------------------------
# Module wrapper: parameters built deterministically in-script.
# ---------------------------------------------------------------------------
class AttentionPallas:
    def __init__(self, dim, num_heads=8, qkv_bias=False, qk_scale=None, key=None):
        self.dim = dim
        self.num_heads = num_heads
        head_dim = dim // num_heads
        self.scale = qk_scale or head_dim ** (-0.5)   # matches torch idiom

        # TODO(synk): qkv_bias=True path not wired (module default is False).
        assert not qkv_bias, "qkv_bias=True not supported in this kernel"

        key = jax.random.PRNGKey(42) if key is None else key
        k1, k2, k3 = jax.random.split(key, 3)
        # Master copies in f32 (reference); weights stored as (in, out) so the
        # kernel computes x @ W directly (== PyTorch x @ weight.T).
        self.w_qkv = jax.random.normal(k1, (dim, 3 * dim), jnp.float32) * 0.02
        self.w_proj = jax.random.normal(k2, (dim, dim), jnp.float32) * 0.02
        self.b_proj = jax.random.normal(k3, (dim,), jnp.float32) * 0.02

        # Fold the attention scale into the Q columns, then cast to bf16:
        # native MXU rate on v5e/v6e/v7x, halves weight DMA bytes and VMEM.
        w_qkv_scaled = self.w_qkv.at[:, :dim].multiply(self.scale)
        self.w_qkv_scaled_bf16 = w_qkv_scaled.astype(jnp.bfloat16)
        self.w_proj_bf16 = self.w_proj.astype(jnp.bfloat16)

    def __call__(self, x):
        return attention_forward(x, self.w_qkv_scaled_bf16, self.w_proj_bf16,
                                 self.b_proj, self.num_heads)


# ---------------------------------------------------------------------------
def _reference(x, mod):
    """Pure-JAX f32 reference (mirrors the PyTorch forward) for sanity checking."""
    B, N, C = x.shape
    H, Dh = mod.num_heads, C // mod.num_heads
    qkv = x.reshape(B * N, C) @ mod.w_qkv                 # unscaled f32 weight
    qkv = qkv.reshape(B, N, 3, H, Dh).transpose(2, 0, 3, 1, 4)
    q, k, v = qkv[0], qkv[1], qkv[2]
    s = jnp.einsum("bhnd,bhmd->bhnm", q, k) * mod.scale
    p = jax.nn.softmax(s, axis=-1)
    o = jnp.einsum("bhnm,bhmd->bhnd", p, v)
    o = o.transpose(0, 2, 1, 3).reshape(B * N, C)
    return (o @ mod.w_proj + mod.b_proj).reshape(B, N, C)


if __name__ == "__main__":
    B, N, C, H = 2, 8, 32, 8   # seq=8, hidden=32, 8 heads -> head_dim=4

    key = jax.random.PRNGKey(0)
    x = jax.random.normal(key, (B, N, C), jnp.float32)

    mod = AttentionPallas(dim=C, num_heads=H)
    out = mod(x)
    out = jax.block_until_ready(out)

    ref = _reference(x, mod)
    assert out.shape == (B, N, C)
    # bf16 MXU operands + approx reciprocal -> tolerance relaxed from 1e-5.
    assert jnp.allclose(out, ref, atol=1e-2, rtol=1e-2), "mismatch vs reference"

    print("KERNEL_OK")
</pallas_src>

<mosaic_0001>
module attributes {stable_mosaic.version = 11 : i64} {
  func.func @_fused_attention_kernel(%arg0: i32, %arg1: memref<1x8x32xf32, #tpu.memory_space<vmem>>, %arg2: memref<32x96xbf16, #tpu.memory_space<vmem>>, %arg3: memref<32x32xbf16, #tpu.memory_space<vmem>>, %arg4: memref<1x32xf32, #tpu.memory_space<vmem>>, %arg5: memref<1x8x32xf32, #tpu.memory_space<vmem>>, %arg6: memref<8x96xbf16, #tpu.memory_space<vmem>>, %arg7: memref<8x32xbf16, #tpu.memory_space<vmem>>) attributes {dimension_semantics = [#tpu.dimension_semantics<parallel>], iteration_bounds = array<i64: 2>, scalar_prefetch = 0 : i64, scratch_operands = 2 : i64, tpu.core_type = #tpu.core_type<tc>, window_params = [{transform_indices = @transform_0, window_bounds = array<i64: 1, 8, 32>}, {pipeline_mode = #tpu.pipeline_mode<synchronous>, transform_indices = @transform_1, window_bounds = array<i64: 32, 96>}, {pipeline_mode = #tpu.pipeline_mode<synchronous>, transform_indices = @transform_2, window_bounds = array<i64: 32, 32>}, {pipeline_mode = #tpu.pipeline_mode<synchronous>, transform_indices = @transform_3, window_bounds = array<i64: 1, 32>}, {transform_indices = @transform_4, window_bounds = array<i64: 1, 8, 32>}]} {
    %c0 = arith.constant 0 : index
    %c0_0 = arith.constant 0 : index
    %c0_1 = arith.constant 0 : index
    %0 = vector.load %arg1[%c0, %c0_0, %c0_1] : memref<1x8x32xf32, #tpu.memory_space<vmem>>, vector<1x8x32xf32>
    %1 = vector.shape_cast %0 : vector<1x8x32xf32> to vector<8x32xf32>
    %2 = arith.truncf %1 : vector<8x32xf32> to vector<8x32xbf16>
    %c0_2 = arith.constant 0 : index
    %c0_3 = arith.constant 0 : index
    %3 = vector.load %arg2[%c0_2, %c0_3] : memref<32x96xbf16, #tpu.memory_space<vmem>>, vector<32x96xbf16>
    %cst = arith.constant dense<0.000000e+00> : vector<8x96xf32>
    %4 = tpu.matmul %2, %3, %cst {dimension_numbers = #tpu.dot_dimension_numbers<[1], [0], [0], [1], [0, 0, 1, 1], [], []>} : vector<8x32xbf16>, vector<32x96xbf16>, vector<8x96xf32> -> vector<8x96xf32>
    %5 = arith.truncf %4 : vector<8x96xf32> to vector<8x96xbf16>
    %c0_4 = arith.constant 0 : index
    %c0_5 = arith.constant 0 : index
    %6 = vector.load %arg6[%c0_4, %c0_5] : memref<8x96xbf16, #tpu.memory_space<vmem>>, vector<8x96xbf16>
    tpu.vector_store %arg6[%c0_4, %c0_5], %5 {strides = array<i32>} : memref<8x96xbf16, #tpu.memory_space<vmem>>, vector<8x96xbf16>,
    %c0_6 = arith.constant 0 : index
    %c0_7 = arith.constant 0 : index
    %7 = vector.load %arg6[%c0_6, %c0_7] : memref<8x96xbf16, #tpu.memory_space<vmem>>, vector<8x4xbf16>
    %c0_8 = arith.constant 0 : index
    %c32 = arith.constant 32 : index
    %8 = vector.load %arg6[%c0_8, %c32] : memref<8x96xbf16, #tpu.memory_space<vmem>>, vector<8x4xbf16>
    %c0_9 = arith.constant 0 : index
    %c64 = arith.constant 64 : index
    %9 = vector.load %arg6[%c0_9, %c64] : memref<8x96xbf16, #tpu.memory_space<vmem>>, vector<8x4xbf16>
    %cst_10 = arith.constant dense<0.000000e+00> : vector<8x8xf32>
    %10 = tpu.matmul %7, %8, %cst_10 {dimension_numbers = #tpu.dot_dimension_numbers<[1], [1], [0], [0], [0, 0, 1, 0], [], []>} : vector<8x4xbf16>, vector<8x4xbf16>, vector<8x8xf32> -> vector<8x8xf32>
    %cst_11 = arith.constant dense<0xFF800000> : vector<8xf32>
    %11 = vector.multi_reduction <maximumf>, %10, %cst_11 [1] : vector<8x8xf32> to vector<8xf32>
    %12 = vector.shape_cast %11 : vector<8xf32> to vector<8x1xf32>
    %13 = vector.broadcast %12 : vector<8x1xf32> to vector<8x8xf32>
    %14 = arith.subf %10, %13 : vector<8x8xf32>
    %15 = math.exp %14 : vector<8x8xf32>
    %cst_12 = arith.constant dense<0.000000e+00> : vector<8xf32>
    %16 = vector.multi_reduction <add>, %15, %cst_12 [1] : vector<8x8xf32> to vector<8xf32>
    %17 = vector.shape_cast %16 : vector<8xf32> to vector<8x1xf32>
    %18 = tpu.reciprocal %17 {approx = true} : vector<8x1xf32> -> vector<8x1xf32>
    %19 = arith.truncf %15 : vector<8x8xf32> to vector<8x8xbf16>
    %cst_13 = arith.constant dense<0.000000e+00> : vector<8x4xf32>
    %20 = tpu.matmul %19, %9, %cst_13 {dimension_numbers = #tpu.dot_dimension_numbers<[1], [0], [0], [1], [0, 0, 1, 1], [], []>} : vector<8x8xbf16>, vector<8x4xbf16>, vector<8x4xf32> -> vector<8x4xf32>
    %21 = vector.broadcast %18 : vector<8x1xf32> to vector<8x4xf32>
    %22 = arith.mulf %20, %21 : vector<8x4xf32>
    %23 = arith.truncf %22 : vector<8x4xf32> to vector<8x4xbf16>
    %c0_14 = arith.constant 0 : index
    %c0_15 = arith.constant 0 : index
    %24 = vector.load %arg7[%c0_14, %c0_15] : memref<8x32xbf16, #tpu.memory_space<vmem>>, vector<8x4xbf16>
    tpu.vector_store %arg7[%c0_14, %c0_15], %23 {strides = array<i32>} : memref<8x32xbf16, #tpu.memory_space<vmem>>, vector<8x4xbf16>,
    %c0_16 = arith.constant 0 : index
    %c4 = arith.constant 4 : index
    %25 = vector.load %arg6[%c0_16, %c4] : memref<8x96xbf16, #tpu.memory_space<vmem>>, vector<8x4xbf16>
    %c0_17 = arith.constant 0 : index
    %c36 = arith.constant 36 : index
    %26 = vector.load %arg6[%c0_17, %c36] : memref<8x96xbf16, #tpu.memory_space<vmem>>, vector<8x4xbf16>
    %c0_18 = arith.constant 0 : index
    %c68 = arith.constant 68 : index
    %27 = vector.load %arg6[%c0_18, %c68] : memref<8x96xbf16, #tpu.memory_space<vmem>>, vector<8x4xbf16>
    %cst_19 = arith.constant dense<0.000000e+00> : vector<8x8xf32>
    %28 = tpu.matmul %25, %26, %cst_19 {dimension_numbers = #tpu.dot_dimension_numbers<[1], [1], [0], [0], [0, 0, 1, 0], [], []>} : vector<8x4xbf16>, vector<8x4xbf16>, vector<8x8xf32> -> vector<8x8xf32>
    %cst_20 = arith.constant dense<0xFF800000> : vector<8xf32>
    %29 = vector.multi_reduction <maximumf>, %28, %cst_20 [1] : vector<8x8xf32> to vector<8xf32>
    %30 = vector.shape_cast %29 : vector<8xf32> to vector<8x1xf32>
    %31 = vector.broadcast %30 : vector<8x1xf32> to vector<8x8xf32>
    %32 = arith.subf %28, %31 : vector<8x8xf32>
    %33 = math.exp %32 : vector<8x8xf32>
    %cst_21 = arith.constant dense<0.000000e+00> : vector<8xf32>
    %34 = vector.multi_reduction <add>, %33, %cst_21 [1] : vector<8x8xf32> to vector<8xf32>
    %35 = vector.shape_cast %34 : vector<8xf32> to vector<8x1xf32>
    %36 = tpu.reciprocal %35 {approx = true} : vector<8x1xf32> -> vector<8x1xf32>
    %37 = arith.truncf %33 : vector<8x8xf32> to vector<8x8xbf16>
    %cst_22 = arith.constant dense<0.000000e+00> : vector<8x4xf32>
    %38 = tpu.matmul %37, %27, %cst_22 {dimension_numbers = #tpu.dot_dimension_numbers<[1], [0], [0], [1], [0, 0, 1, 1], [], []>} : vector<8x8xbf16>, vector<8x4xbf16>, vector<8x4xf32> -> vector<8x4xf32>
    %39 = vector.broadcast %36 : vector<8x1xf32> to vector<8x4xf32>
    %40 = arith.mulf %38, %39 : vector<8x4xf32>
    %41 = arith.truncf %40 : vector<8x4xf32> to vector<8x4xbf16>
    %c0_23 = arith.constant 0 : index
    %c4_24 = arith.constant 4 : index
    %42 = vector.load %arg7[%c0_23, %c4_24] : memref<8x32xbf16, #tpu.memory_space<vmem>>, vector<8x4xbf16>
    tpu.vector_store %arg7[%c0_23, %c4_24], %41 {strides = array<i32>} : memref<8x32xbf16, #tpu.memory_space<vmem>>, vector<8x4xbf16>,
    %c0_25 = arith.constant 0 : index
    %c8 = arith.constant 8 : index
    %43 = vector.load %arg6[%c0_25, %c8] : memref<8x96xbf16, #tpu.memory_space<vmem>>, vector<8x4xbf16>
    %c0_26 = arith.constant 0 : index
    %c40 = arith.constant 40 : index
    %44 = vector.load %arg6[%c0_26, %c40] : memref<8x96xbf16, #tpu.memory_space<vmem>>, vector<8x4xbf16>
    %c0_27 = arith.constant 0 : index
    %c72 = arith.constant 72 : index
    %45 = vector.load %arg6[%c0_27, %c72] : memref<8x96xbf16, #tpu.memory_space<vmem>>, vector<8x4xbf16>
    %cst_28 = arith.constant dense<0.000000e+00> : vector<8x8xf32>
    %46 = tpu.matmul %43, %44, %cst_28 {dimension_numbers = #tpu.dot_dimension_numbers<[1], [1], [0], [0], [0, 0, 1, 0], [], []>} : vector<8x4xbf16>, vector<8x4xbf16>, vector<8x8xf32> -> vector<8x8xf32>
    %cst_29 = arith.constant dense<0xFF800000> : vector<8xf32>
    %47 = vector.multi_reduction <maximumf>, %46, %cst_29 [1] : vector<8x8xf32> to vector<8xf32>
    %48 = vector.shape_cast %47 : vector<8xf32> to vector<8x1xf32>
    %49 = vector.broadcast %48 : vector<8x1xf32> to vector<8x8xf32>
    %50 = arith.subf %46, %49 : vector<8x8xf32>
    %51 = math.exp %50 : vector<8x8xf32>
    %cst_30 = arith.constant dense<0.000000e+00> : vector<8xf32>
    %52 = vector.multi_reduction <add>, %51, %cst_30 [1] : vector<8x8xf32> to vector<8xf32>
    %53 = vector.shape_cast %52 : vector<8xf32> to vector<8x1xf32>
    %54 = tpu.reciprocal %53 {approx = true} : vector<8x1xf32> -> vector<8x1xf32>
    %55 = arith.truncf %51 : vector<8x8xf32> to vector<8x8xbf16>
    %cst_31 = arith.constant dense<0.000000e+00> : vector<8x4xf32>
    %56 = tpu.matmul %55, %45, %cst_31 {dimension_numbers = #tpu.dot_dimension_numbers<[1], [0], [0], [1], [0, 0, 1, 1], [], []>} : vector<8x8xbf16>, vector<8x4xbf16>, vector<8x4xf32> -> vector<8x4xf32>
    %57 = vector.broadcast %54 : vector<8x1xf32> to vector<8x4xf32>
    %58 = arith.mulf %56, %57 : vector<8x4xf32>
    %59 = arith.truncf %58 : vector<8x4xf32> to vector<8x4xbf16>
    %c0_32 = arith.constant 0 : index
    %c8_33 = arith.constant 8 : index
    %60 = vector.load %arg7[%c0_32, %c8_33] : memref<8x32xbf16, #tpu.memory_space<vmem>>, vector<8x4xbf16>
    tpu.vector_store %arg7[%c0_32, %c8_33], %59 {strides = array<i32>} : memref<8x32xbf16, #tpu.memory_space<vmem>>, vector<8x4xbf16>,
    %c0_34 = arith.constant 0 : index
    %c12 = arith.constant 12 : index
    %61 = vector.load %arg6[%c0_34, %c12] : memref<8x96xbf16, #tpu.memory_space<vmem>>, vector<8x4xbf16>
    %c0_35 = arith.constant 0 : index
    %c44 = arith.constant 44 : index
    %62 = vector.load %arg6[%c0_35, %c44] : memref<8x96xbf16, #tpu.memory_space<vmem>>, vector<8x4xbf16>
    %c0_36 = arith.constant 0 : index
    %c76 = arith.constant 76 : index
    %63 = vector.load %arg6[%c0_36, %c76] : memref<8x96xbf16, #tpu.memory_space<vmem>>, vector<8x4xbf16>
    %cst_37 = arith.constant dense<0.000000e+00> : vector<8x8xf32>
    %64 = tpu.matmul %61, %62, %cst_37 {dimension_numbers = #tpu.dot_dimension_numbers<[1], [1], [0], [0], [0, 0, 1, 0], [], []>} : vector<8x4xbf16>, vector<8x4xbf16>, vector<8x8xf32> -> vector<8x8xf32>
    %cst_38 = arith.constant dense<0xFF800000> : vector<8xf32>
    %65 = vector.multi_reduction <maximumf>, %64, %cst_38 [1] : vector<8x8xf32> to vector<8xf32>
    %66 = vector.shape_cast %65 : vector<8xf32> to vector<8x1xf32>
    %67 = vector.broadcast %66 : vector<8x1xf32> to vector<8x8xf32>
    %68 = arith.subf %64, %67 : vector<8x8xf32>
    %69 = math.exp %68 : vector<8x8xf32>
    %cst_39 = arith.constant dense<0.000000e+00> : vector<8xf32>
    %70 = vector.multi_reduction <add>, %69, %cst_39 [1] : vector<8x8xf32> to vector<8xf32>
    %71 = vector.shape_cast %70 : vector<8xf32> to vector<8x1xf32>
    %72 = tpu.reciprocal %71 {approx = true} : vector<8x1xf32> -> vector<8x1xf32>
    %73 = arith.truncf %69 : vector<8x8xf32> to vector<8x8xbf16>
    %cst_40 = arith.constant dense<0.000000e+00> : vector<8x4xf32>
    %74 = tpu.matmul %73, %63, %cst_40 {dimension_numbers = #tpu.dot_dimension_numbers<[1], [0], [0], [1], [0, 0, 1, 1], [], []>} : vector<8x8xbf16>, vector<8x4xbf16>, vector<8x4xf32> -> vector<8x4xf32>
    %75 = vector.broadcast %72 : vector<8x1xf32> to vector<8x4xf32>
    %76 = arith.mulf %74, %75 : vector<8x4xf32>
    %77 = arith.truncf %76 : vector<8x4xf32> to vector<8x4xbf16>
    %c0_41 = arith.constant 0 : index
    %c12_42 = arith.constant 12 : index
    %78 = vector.load %arg7[%c0_41, %c12_42] : memref<8x32xbf16, #tpu.memory_space<vmem>>, vector<8x4xbf16>
    tpu.vector_store %arg7[%c0_41, %c12_42], %77 {strides = array<i32>} : memref<8x32xbf16, #tpu.memory_space<vmem>>, vector<8x4xbf16>,
    %c0_43 = arith.constant 0 : index
    %c16 = arith.constant 16 : index
    %79 = vector.load %arg6[%c0_43, %c16] : memref<8x96xbf16, #tpu.memory_space<vmem>>, vector<8x4xbf16>
    %c0_44 = arith.constant 0 : index
    %c48 = arith.constant 48 : index
    %80 = vector.load %arg6[%c0_44, %c48] : memref<8x96xbf16, #tpu.memory_space<vmem>>, vector<8x4xbf16>
    %c0_45 = arith.constant 0 : index
    %c80 = arith.constant 80 : index
    %81 = vector.load %arg6[%c0_45, %c80] : memref<8x96xbf16, #tpu.memory_space<vmem>>, vector<8x4xbf16>
    %cst_46 = arith.constant dense<0.000000e+00> : vector<8x8xf32>
    %82 = tpu.matmul %79, %80, %cst_46 {dimension_numbers = #tpu.dot_dimension_numbers<[1], [1], [0], [0], [0, 0, 1, 0], [], []>} : vector<8x4xbf16>, vector<8x4xbf16>, vector<8x8xf32> -> vector<8x8xf32>
    %cst_47 = arith.constant dense<0xFF800000> : vector<8xf32>
    %83 = vector.multi_reduction <maximumf>, %82, %cst_47 [1] : vector<8x8xf32> to vector<8xf32>
    %84 = vector.shape_cast %83 : vector<8xf32> to vector<8x1xf32>
    %85 = vector.broadcast %84 : vector<8x1xf32> to vector<8x8xf32>
    %86 = arith.subf %82, %85 : vector<8x8xf32>
    %87 = math.exp %86 : vector<8x8xf32>
    %cst_48 = arith.constant dense<0.000000e+00> : vector<8xf32>
    %88 = vector.multi_reduction <add>, %87, %cst_48 [1] : vector<8x8xf32> to vector<8xf32>
    %89 = vector.shape_cast %88 : vector<8xf32> to vector<8x1xf32>
    %90 = tpu.reciprocal %89 {approx = true} : vector<8x1xf32> -> vector<8x1xf32>
    %91 = arith.truncf %87 : vector<8x8xf32> to vector<8x8xbf16>
    %cst_49 = arith.constant dense<0.000000e+00> : vector<8x4xf32>
    %92 = tpu.matmul %91, %81, %cst_49 {dimension_numbers = #tpu.dot_dimension_numbers<[1], [0], [0], [1], [0, 0, 1, 1], [], []>} : vector<8x8xbf16>, vector<8x4xbf16>, vector<8x4xf32> -> vector<8x4xf32>
    %93 = vector.broadcast %90 : vector<8x1xf32> to vector<8x4xf32>
    %94 = arith.mulf %92, %93 : vector<8x4xf32>
    %95 = arith.truncf %94 : vector<8x4xf32> to vector<8x4xbf16>
    %c0_50 = arith.constant 0 : index
    %c16_51 = arith.constant 16 : index
    %96 = vector.load %arg7[%c0_50, %c16_51] : memref<8x32xbf16, #tpu.memory_space<vmem>>, vector<8x4xbf16>
    tpu.vector_store %arg7[%c0_50, %c16_51], %95 {strides = array<i32>} : memref<8x32xbf16, #tpu.memory_space<vmem>>, vector<8x4xbf16>,
    %c0_52 = arith.constant 0 : index
    %c20 = arith.constant 20 : index
    %97 = vector.load %arg6[%c0_52, %c20] : memref<8x96xbf16, #tpu.memory_space<vmem>>, vector<8x4xbf16>
    %c0_53 = arith.constant 0 : index
    %c52 = arith.constant 52 : index
    %98 = vector.load %arg6[%c0_53, %c52] : memref<8x96xbf16, #tpu.memory_space<vmem>>, vector<8x4xbf16>
    %c0_54 = arith.constant 0 : index
    %c84 = arith.constant 84 : index
    %99 = vector.load %arg6[%c0_54, %c84] : memref<8x96xbf16, #tpu.memory_space<vmem>>, vector<8x4xbf16>
    %cst_55 = arith.constant dense<0.000000e+00> : vector<8x8xf32>
    %100 = tpu.matmul %97, %98, %cst_55 {dimension_numbers = #tpu.dot_dimension_numbers<[1], [1], [0], [0], [0, 0, 1, 0], [], []>} : vector<8x4xbf16>, vector<8x4xbf16>, vector<8x8xf32> -> vector<8x8xf32>
    %cst_56 = arith.constant dense<0xFF800000> : vector<8xf32>
    %101 = vector.multi_reduction <maximumf>, %100, %cst_56 [1] : vector<8x8xf32> to vector<8xf32>
    %102 = vector.shape_cast %101 : vector<8xf32> to vector<8x1xf32>
    %103 = vector.broadcast %102 : vector<8x1xf32> to vector<8x8xf32>
    %104 = arith.subf %100, %103 : vector<8x8xf32>
    %105 = math.exp %104 : vector<8x8xf32>
    %cst_57 = arith.constant dense<0.000000e+00> : vector<8xf32>
    %106 = vector.multi_reduction <add>, %105, %cst_57 [1] : vector<8x8xf32> to vector<8xf32>
    %107 = vector.shape_cast %106 : vector<8xf32> to vector<8x1xf32>
    %108 = tpu.reciprocal %107 {approx = true} : vector<8x1xf32> -> vector<8x1xf32>
    %109 = arith.truncf %105 : vector<8x8xf32> to vector<8x8xbf16>
    %cst_58 = arith.constant dense<0.000000e+00> : vector<8x4xf32>
    %110 = tpu.matmul %109, %99, %cst_58 {dimension_numbers = #tpu.dot_dimension_numbers<[1], [0], [0], [1], [0, 0, 1, 1], [], []>} : vector<8x8xbf16>, vector<8x4xbf16>, vector<8x4xf32> -> vector<8x4xf32>
    %111 = vector.broadcast %108 : vector<8x1xf32> to vector<8x4xf32>
    %112 = arith.mulf %110, %111 : vector<8x4xf32>
    %113 = arith.truncf %112 : vector<8x4xf32> to vector<8x4xbf16>
    %c0_59 = arith.constant 0 : index
    %c20_60 = arith.constant 20 : index
    %114 = vector.load %arg7[%c0_59, %c20_60] : memref<8x32xbf16, #tpu.memory_space<vmem>>, vector<8x4xbf16>
    tpu.vector_store %arg7[%c0_59, %c20_60], %113 {strides = array<i32>} : memref<8x32xbf16, #tpu.memory_space<vmem>>, vector<8x4xbf16>,
    %c0_61 = arith.constant 0 : index
    %c24 = arith.constant 24 : index
    %115 = vector.load %arg6[%c0_61, %c24] : memref<8x96xbf16, #tpu.memory_space<vmem>>, vector<8x4xbf16>
    %c0_62 = arith.constant 0 : index
    %c56 = arith.constant 56 : index
    %116 = vector.load %arg6[%c0_62, %c56] : memref<8x96xbf16, #tpu.memory_space<vmem>>, vector<8x4xbf16>
    %c0_63 = arith.constant 0 : index
    %c88 = arith.constant 88 : index
    %117 = vector.load %arg6[%c0_63, %c88] : memref<8x96xbf16, #tpu.memory_space<vmem>>, vector<8x4xbf16>
    %cst_64 = arith.constant dense<0.000000e+00> : vector<8x8xf32>
    %118 = tpu.matmul %115, %116, %cst_64 {dimension_numbers = #tpu.dot_dimension_numbers<[1], [1], [0], [0], [0, 0, 1, 0], [], []>} : vector<8x4xbf16>, vector<8x4xbf16>, vector<8x8xf32> -> vector<8x8xf32>
    %cst_65 = arith.constant dense<0xFF800000> : vector<8xf32>
    %119 = vector.multi_reduction <maximumf>, %118, %cst_65 [1] : vector<8x8xf32> to vector<8xf32>
    %120 = vector.shape_cast %119 : vector<8xf32> to vector<8x1xf32>
    %121 = vector.broadcast %120 : vector<8x1xf32> to vector<8x8xf32>
    %122 = arith.subf %118, %121 : vector<8x8xf32>
    %123 = math.exp %122 : vector<8x8xf32>
    %cst_66 = arith.constant dense<0.000000e+00> : vector<8xf32>
    %124 = vector.multi_reduction <add>, %123, %cst_66 [1] : vector<8x8xf32> to vector<8xf32>
    %125 = vector.shape_cast %124 : vector<8xf32> to vector<8x1xf32>
    %126 = tpu.reciprocal %125 {approx = true} : vector<8x1xf32> -> vector<8x1xf32>
    %127 = arith.truncf %123 : vector<8x8xf32> to vector<8x8xbf16>
    %cst_67 = arith.constant dense<0.000000e+00> : vector<8x4xf32>
    %128 = tpu.matmul %127, %117, %cst_67 {dimension_numbers = #tpu.dot_dimension_numbers<[1], [0], [0], [1], [0, 0, 1, 1], [], []>} : vector<8x8xbf16>, vector<8x4xbf16>, vector<8x4xf32> -> vector<8x4xf32>
    %129 = vector.broadcast %126 : vector<8x1xf32> to vector<8x4xf32>
    %130 = arith.mulf %128, %129 : vector<8x4xf32>
    %131 = arith.truncf %130 : vector<8x4xf32> to vector<8x4xbf16>
    %c0_68 = arith.constant 0 : index
    %c24_69 = arith.constant 24 : index
    %132 = vector.load %arg7[%c0_68, %c24_69] : memref<8x32xbf16, #tpu.memory_space<vmem>>, vector<8x4xbf16>
    tpu.vector_store %arg7[%c0_68, %c24_69], %131 {strides = array<i32>} : memref<8x32xbf16, #tpu.memory_space<vmem>>, vector<8x4xbf16>,
    %c0_70 = arith.constant 0 : index
    %c28 = arith.constant 28 : index
    %133 = vector.load %arg6[%c0_70, %c28] : memref<8x96xbf16, #tpu.memory_space<vmem>>, vector<8x4xbf16>
    %c0_71 = arith.constant 0 : index
    %c60 = arith.constant 60 : index
    %134 = vector.load %arg6[%c0_71, %c60] : memref<8x96xbf16, #tpu.memory_space<vmem>>, vector<8x4xbf16>
    %c0_72 = arith.constant 0 : index
    %c92 = arith.constant 92 : index
    %135 = vector.load %arg6[%c0_72, %c92] : memref<8x96xbf16, #tpu.memory_space<vmem>>, vector<8x4xbf16>
    %cst_73 = arith.constant dense<0.000000e+00> : vector<8x8xf32>
    %136 = tpu.matmul %133, %134, %cst_73 {dimension_numbers = #tpu.dot_dimension_numbers<[1], [1], [0], [0], [0, 0, 1, 0], [], []>} : vector<8x4xbf16>, vector<8x4xbf16>, vector<8x8xf32> -> vector<8x8xf32>
    %cst_74 = arith.constant dense<0xFF800000> : vector<8xf32>
    %137 = vector.multi_reduction <maximumf>, %136, %cst_74 [1] : vector<8x8xf32> to vector<8xf32>
    %138 = vector.shape_cast %137 : vector<8xf32> to vector<8x1xf32>
    %139 = vector.broadcast %138 : vector<8x1xf32> to vector<8x8xf32>
    %140 = arith.subf %136, %139 : vector<8x8xf32>
    %141 = math.exp %140 : vector<8x8xf32>
    %cst_75 = arith.constant dense<0.000000e+00> : vector<8xf32>
    %142 = vector.multi_reduction <add>, %141, %cst_75 [1] : vector<8x8xf32> to vector<8xf32>
    %143 = vector.shape_cast %142 : vector<8xf32> to vector<8x1xf32>
    %144 = tpu.reciprocal %143 {approx = true} : vector<8x1xf32> -> vector<8x1xf32>
    %145 = arith.truncf %141 : vector<8x8xf32> to vector<8x8xbf16>
    %cst_76 = arith.constant dense<0.000000e+00> : vector<8x4xf32>
    %146 = tpu.matmul %145, %135, %cst_76 {dimension_numbers = #tpu.dot_dimension_numbers<[1], [0], [0], [1], [0, 0, 1, 1], [], []>} : vector<8x8xbf16>, vector<8x4xbf16>, vector<8x4xf32> -> vector<8x4xf32>
    %147 = vector.broadcast %144 : vector<8x1xf32> to vector<8x4xf32>
    %148 = arith.mulf %146, %147 : vector<8x4xf32>
    %149 = arith.truncf %148 : vector<8x4xf32> to vector<8x4xbf16>
    %c0_77 = arith.constant 0 : index
    %c28_78 = arith.constant 28 : index
    %150 = vector.load %arg7[%c0_77, %c28_78] : memref<8x32xbf16, #tpu.memory_space<vmem>>, vector<8x4xbf16>
    tpu.vector_store %arg7[%c0_77, %c28_78], %149 {strides = array<i32>} : memref<8x32xbf16, #tpu.memory_space<vmem>>, vector<8x4xbf16>,
    %c0_79 = arith.constant 0 : index
    %c0_80 = arith.constant 0 : index
    %151 = vector.load %arg7[%c0_79, %c0_80] : memref<8x32xbf16, #tpu.memory_space<vmem>>, vector<8x32xbf16>
    %c0_81 = arith.constant 0 : index
    %c0_82 = arith.constant 0 : index
    %152 = vector.load %arg3[%c0_81, %c0_82] : memref<32x32xbf16, #tpu.memory_space<vmem>>, vector<32x32xbf16>
    %cst_83 = arith.constant dense<0.000000e+00> : vector<8x32xf32>
    %153 = tpu.matmul %151, %152, %cst_83 {dimension_numbers = #tpu.dot_dimension_numbers<[1], [0], [0], [1], [0, 0, 1, 1], [], []>} : vector<8x32xbf16>, vector<32x32xbf16>, vector<8x32xf32> -> vector<8x32xf32>
    %c0_84 = arith.constant 0 : index
    %c0_85 = arith.constant 0 : index
    %154 = vector.load %arg4[%c0_84, %c0_85] : memref<1x32xf32, #tpu.memory_space<vmem>>, vector<1x32xf32>
    %155 = vector.broadcast %154 : vector<1x32xf32> to vector<8x32xf32>
    %156 = arith.addf %153, %155 : vector<8x32xf32>
    %c0_86 = arith.constant 0 : index
    %c0_87 = arith.constant 0 : index
    %c0_88 = arith.constant 0 : index
    %157 = vector.load %arg5[%c0_86, %c0_87, %c0_88] : memref<1x8x32xf32, #tpu.memory_space<vmem>>, vector<1x8x32xf32>
    %158 = vector.shape_cast %157 : vector<1x8x32xf32> to vector<8x32xf32>
    %159 = vector.shape_cast %156 : vector<8x32xf32> to vector<1x8x32xf32>
    tpu.vector_store %arg5[%c0_86, %c0_87, %c0_88], %159 {strides = array<i32>} : memref<1x8x32xf32, #tpu.memory_space<vmem>>, vector<1x8x32xf32>,
    return
  }
  func.func @transform_0(%arg0: i32) -> (i32, i32, i32) {
    %c0_i32 = arith.constant 0 : i32
    %c0_i32_0 = arith.constant 0 : i32
    %c0_i32_1 = arith.constant 0 : i32
    return %arg0, %c0_i32, %c0_i32_0 : i32, i32, i32
  }
  func.func @transform_1(%arg0: i32) -> (i32, i32) {
    %c0_i32 = arith.constant 0 : i32
    %c0_i32_0 = arith.constant 0 : i32
    %c0_i32_1 = arith.constant 0 : i32
    return %c0_i32, %c0_i32_0 : i32, i32
  }
  func.func @transform_2(%arg0: i32) -> (i32, i32) {
    %c0_i32 = arith.constant 0 : i32
    %c0_i32_0 = arith.constant 0 : i32
    %c0_i32_1 = arith.constant 0 : i32
    return %c0_i32, %c0_i32_0 : i32, i32
  }
  func.func @transform_3(%arg0: i32) -> (i32, i32) {
    %c0_i32 = arith.constant 0 : i32
    %c0_i32_0 = arith.constant 0 : i32
    %c0_i32_1 = arith.constant 0 : i32
    return %c0_i32, %c0_i32_0 : i32, i32
  }
  func.func @transform_4(%arg0: i32) -> (i32, i32, i32) {
    %c0_i32 = arith.constant 0 : i32
    %c0_i32_0 = arith.constant 0 : i32
    %c0_i32_1 = arith.constant 0 : i32
    return %arg0, %c0_i32, %c0_i32_0 : i32, i32, i32
  }
}

</mosaic_0001>

<llo_original>
// kernel: tpu_custom_call.1
$region0: #{tpu_custom_call.1}
  #allocation0 [shape = 'u32[]', space=smem, size = 0x4, offset = 0x4, fixed_abs, tag = 'smem constant byte address 0x4 - core index']
  #allocation1 [shape = 'u32[72,128]{1,0:T(1,128)}', space=vmem, size = 0x9000, scoped, tag = 'internal scratch']
  #allocation2 [shape = 'bf16[8,96]{1,0:T(8,128)(2,1)}', space=vmem, size = 0x800, scoped, tag = 'scratch operand']
  #allocation3 [shape = 'bf16[8,32]{1,0:T(8,128)(2,1)}', space=vmem, size = 0x800, scoped, tag = 'scratch operand']
  %s0 = inlined_call_operand.hbm [shape: f32[2,8,32], index: 0, kind: input, shape index: {}]
  %s1 = inlined_call_operand.hbm [shape: bf16[32,96], index: 1, kind: input, shape index: {}]
  %s2 = inlined_call_operand.hbm [shape: bf16[32,32], index: 2, kind: input, shape index: {}]
  %s3 = inlined_call_operand.vmem [shape: f32[1,32], index: 3, kind: input, shape index: {}]
  %s4 = inlined_call_operand.hbm [shape: f32[2,8,32], index: 4, kind: output, shape index: {}]
  %s5 = sld [smem:[#allocation0]]
  $region61: #{tpu_custom_call.1} parent=0
    _
  %s7 = ssub.s32 1, %s5
  %s8 = scalar_select 0, %s7, %s5
  $region1: #{tpu_custom_call.1} parent=0
    #allocation4 [shape = 'u8[8192]{0}', space=vmem, size = 0x2000, scoped, tag = 'input window, operand 0']
    #allocation5 [shape = 's32[2]{0}', space=sflag, size = 0x8, scoped, tag = 'scoped memory for tpu_custom_call.1']
    #allocation6 [shape = 's32[2]{0}', space=sflag, size = 0x8, scoped, tag = 'scoped memory for tpu_custom_call.1']
    #allocation7 [shape = 'u8[8192]{0}', space=vmem, size = 0x2000, scoped, tag = 'input window, operand 1, single buffered']
    #allocation8 [shape = 's32[1]{0}', space=sflag, size = 0x4, scoped, tag = 'scoped memory for tpu_custom_call.1']
    #allocation9 [shape = 'u8[8192]{0}', space=vmem, size = 0x2000, scoped, tag = 'input window, operand 2, single buffered']
    #allocation10 [shape = 'u8[8192]{0}', space=vmem, size = 0x2000, scoped, tag = 'output window, operand 0']
    %9 = vsyncpa [#allocation5], 0
    %s10 = scalar_lea.sflag [#allocation5], 1
    %11 = vsyncpa %s10, 0
    %12 = vsyncpa [#allocation8], 0
    %13 = vsyncpa [#allocation6], 0
    %s14 = scalar_lea.sflag [#allocation6], 1
    %15 = vsyncpa %s14, 0
    loop: start=0, step=1, limit=4
    $region2: #{tpu_custom_call.1} parent=1 // loop_pre_header
      _
    $region3: #{tpu_custom_call.1} parent=1 // loop_header
      %s17 = sphi 0, %s21
      %p18 = scmp.ge.s32.totalorder %s17, 4
      %s27 = sphi 0, %s29
      %s30 = sphi 0, %s27
      %s31 = sphi 0, %s30
      %s47 = sphi 0, %s31
      %s51 = sphi 0, %s51
      %s53 = sphi 0, %s51
      %s54 = sphi 0, %s53
      %s68 = sphi 0, %s54
      %s72 = sphi 0, %s72
      %s74 = sphi 0, %s72
      %s75 = sphi 0, %s74
      %s89 = sphi 0, %s75
      %s93 = sphi 0, %s93
      %s95 = sphi 0, %s93
      %s96 = sphi 0, %s95
      %s110 = sphi 0, %s96
      %s116 = sphi 0, %s118
      %s119 = sphi 0, %s116
      %s120 = sphi 0, %s119
      %s136 = sphi 0, %s120
    $region4: #{tpu_custom_call.1} parent=1 // loop_header_branch
      %20 = sbr.rel (%p18) target = $region8
    $region5: #{tpu_custom_call.1} parent=1 // loop_body
      %s22 = ssub.s32 %s17, 1
      %s23 = ssub.s32 %s17, 2
      %s24 = sadd.s32 %s17, 1
      %s25 = ssub.s32 %s17, %s24
      %p26 = scmp.eq.s32.totalorder %s25, 0
      %s28 = sadd.s32 %s27, 1
      %s29 = scalar_select %p26, %s27, %s28
      %p32 = pneg %p26
      %p33 = scmp.eq.s32.totalorder %s17, 1
      %p34 = por %p32, %p33
      %p35 = scmp.ne.s32.totalorder %s27, %s30
      %p36 = scmp.eq.s32.totalorder %s17, 0
      %p37 = por %p35, %p36
      %p38 = scmp.ne.s32.totalorder %s27, %s30
      %p39 = scmp.eq.s32.totalorder %s22, 1
      %p40 = por %p38, %p39
      %p41 = scmp.ne.s32.totalorder %s30, %s31
      %p42 = scmp.eq.s32.totalorder %s22, 0
      %p43 = por %p41, %p42
      %p44 = scmp.ne.s32.totalorder %s30, %s31
      %p45 = scmp.eq.s32.totalorder %s23, 1
      %p46 = por %p44, %p45
      %p48 = scmp.ne.s32.totalorder %s31, %s47
      %p49 = scmp.eq.s32.totalorder %s23, 0
      %p50 = por %p48, %p49
      %s52 = sadd.s32 %s51, 1
      %p55 = scmp.eq.s32.totalorder %s17, 1
      %p56 = scmp.ne.s32.totalorder %s51, %s53
      %p57 = scmp.eq.s32.totalorder %s17, 0
      %p58 = por %p56, %p57
      %p59 = scmp.ne.s32.totalorder %s51, %s53
      %p60 = scmp.eq.s32.totalorder %s22, 1
      %p61 = por %p59, %p60
      %p62 = scmp.ne.s32.totalorder %s53, %s54
      %p63 = scmp.eq.s32.totalorder %s22, 0
      %p64 = por %p62, %p63
      %p65 = scmp.ne.s32.totalorder %s53, %s54
      %p66 = scmp.eq.s32.totalorder %s23, 1
      %p67 = por %p65, %p66
      %p69 = scmp.ne.s32.totalorder %s54, %s68
      %p70 = scmp.eq.s32.totalorder %s23, 0
      %p71 = por %p69, %p70
      %s73 = sadd.s32 %s72, 1
      %p76 = scmp.eq.s32.totalorder %s17, 1
      %p77 = scmp.ne.s32.totalorder %s72, %s74
      %p78 = scmp.eq.s32.totalorder %s17, 0
      %p79 = por %p77, %p78
      %p80 = scmp.ne.s32.totalorder %s72, %s74
      %p81 = scmp.eq.s32.totalorder %s22, 1
      %p82 = por %p80, %p81
      %p83 = scmp.ne.s32.totalorder %s74, %s75
      %p84 = scmp.eq.s32.totalorder %s22, 0
      %p85 = por %p83, %p84
      %p86 = scmp.ne.s32.totalorder %s74, %s75
      %p87 = scmp.eq.s32.totalorder %s23, 1
      %p88 = por %p86, %p87
      %p90 = scmp.ne.s32.totalorder %s75, %s89
      %p91 = scmp.eq.s32.totalorder %s23, 0
      %p92 = por %p90, %p91
      %s94 = sadd.s32 %s93, 1
      %p97 = scmp.eq.s32.totalorder %s17, 1
      %p98 = scmp.ne.s32.totalorder %s93, %s95
      %p99 = scmp.eq.s32.totalorder %s17, 0
      %p100 = por %p98, %p99
      %p101 = scmp.ne.s32.totalorder %s93, %s95
      %p102 = scmp.eq.s32.totalorder %s22, 1
      %p103 = por %p101, %p102
      %p104 = scmp.ne.s32.totalorder %s95, %s96
      %p105 = scmp.eq.s32.totalorder %s22, 0
      %p106 = por %p104, %p105
      %p107 = scmp.ne.s32.totalorder %s95, %s96
      %p108 = scmp.eq.s32.totalorder %s23, 1
      %p109 = por %p107, %p108
      %p111 = scmp.ne.s32.totalorder %s96, %s110
      %p112 = scmp.eq.s32.totalorder %s23, 0
      %p113 = por %p111, %p112
      %s114 = ssub.s32 %s17, %s24
      %p115 = scmp.eq.s32.totalorder %s114, 0
      %s117 = sadd.s32 %s116, 1
      %s118 = scalar_select %p115, %s116, %s117
      %p121 = pneg %p115
      %p122 = scmp.eq.s32.totalorder %s17, 1
      %p123 = por %p121, %p122
      %p124 = scmp.ne.s32.totalorder %s116, %s119
      %p125 = scmp.eq.s32.totalorder %s17, 0
      %p126 = por %p124, %p125
      %p127 = scmp.ne.s32.totalorder %s116, %s119
      %p128 = scmp.eq.s32.totalorder %s22, 1
      %p129 = por %p127, %p128
      %p130 = scmp.ne.s32.totalorder %s119, %s120
      %p131 = scmp.eq.s32.totalorder %s22, 0
      %p132 = por %p130, %p131
      %p133 = scmp.ne.s32.totalorder %s119, %s120
      %p134 = scmp.eq.s32.totalorder %s23, 1
      %p135 = por %p133, %p134
      %p137 = scmp.ne.s32.totalorder %s120, %s136
      %p138 = scmp.eq.s32.totalorder %s23, 0
      %p139 = por %p137, %p138
      %p140 = scmp.le.s32.totalorder 1, %s17
      %p141 = scmp.lt.s32.totalorder %s17, 3
      %p142 = pnand %p140, %p141
      %p143 = pneg %p142
      // Predicated region
      $region9: #{tpu_custom_call.1} parent=5 // pred_check
        _
      $region10: #{tpu_custom_call.1} parent=5 // pred_check_branch
        %145 = sbr.rel (%p142) target = $region12
      $region11: #{tpu_custom_call.1} parent=5 // pred_region
        %s146 = ssub.s32 %s17, 1
        // Predicated region
        $region13: #{tpu_custom_call.1} parent=11 // pred_check
          %p147 = pneg %p64
        $region14: #{tpu_custom_call.1} parent=11 // pred_check_branch
          %149 = sbr.rel (%p147) target = $region16
        $region15: #{tpu_custom_call.1} parent=11 // pred_region
          %151 = vsyncadd [#allocation8], 0
          %s152 = sshll.u32 %s1, 4
          %s153 = int_to_ptr.hbm [resolvable:$true] %s152
          %s154 = sshll.u32 [#allocation7], 4
          %s155 = int_to_ptr.vmem [resolvable:$true] %s154
          %160 = dma.hbm_to_vmem [thread:$0]  %s153, 256, %s155, [#allocation8], 64, 64, 4
        $region16: #{tpu_custom_call.1} parent=11 // pred_fallthru
          _
        // Predicated region
        $region17: #{tpu_custom_call.1} parent=11 // pred_check
          %p161 = pneg %p85
        $region18: #{tpu_custom_call.1} parent=11 // pred_check_branch
          %163 = sbr.rel (%p161) target = $region20
        $region19: #{tpu_custom_call.1} parent=11 // pred_region
          %165 = vsyncadd [#allocation8], 0
          %s166 = sshll.u32 %s2, 4
          %s167 = int_to_ptr.hbm [resolvable:$true] %s166
          %s168 = sshll.u32 [#allocation9], 4
          %s169 = int_to_ptr.vmem [resolvable:$true] %s168
          %174 = dma.hbm_to_vmem [thread:$0]  %s167, 256, %s169, [#allocation8], 64, 64, 4
        $region20: #{tpu_custom_call.1} parent=11 // pred_fallthru
          _
        // Predicated region
        $region21: #{tpu_custom_call.1} parent=11 // pred_check
          %p175 = pneg %p106
        $region22: #{tpu_custom_call.1} parent=11 // pred_check_branch
          %177 = sbr.rel (%p175) target = $region24
        $region23: #{tpu_custom_call.1} parent=11 // pred_region
          _
        $region24: #{tpu_custom_call.1} parent=11 // pred_fallthru
          _
      $region12: #{tpu_custom_call.1} parent=5 // pred_fallthru
        _
      %p178 = scmp.lt.s32.totalorder %s17, 2
      // Predicated region
      $region25: #{tpu_custom_call.1} parent=5 // pred_check
        %p179 = pneg %p178
      $region26: #{tpu_custom_call.1} parent=5 // pred_check_branch
        %181 = sbr.rel (%p179) target = $region28
      $region27: #{tpu_custom_call.1} parent=5 // pred_region
        // Predicated region
        $region29: #{tpu_custom_call.1} parent=27 // pred_check
          %p182 = pneg %p37
        $region30: #{tpu_custom_call.1} parent=27 // pred_check_branch
          %184 = sbr.rel (%p182) target = $region32
        $region31: #{tpu_custom_call.1} parent=27 // pred_region
          %s185 = sand.u32 %s27, 1
          %s186 = scalar_lea.sflag [#allocation5], %s185
          %s187 = sand.u32 %s27, 1
          %s188 = smul.addr %s187, 8
          %s189 = scalar_lea.vmem [#allocation4], %s188
          %191 = vsyncadd %s186, 0
          %s192 = smul.addr %s17, 8
          %s193 = scalar_lea.hbm %s0, %s192
          %s195 = sshll.u32 %s193, 4
          %s196 = int_to_ptr.hbm [resolvable:$true] %s195
          %s197 = sshll.u32 %s189, 4
          %s198 = int_to_ptr.vmem [resolvable:$true] %s197
          %200 = dma.hbm_to_vmem [thread:$0]  %s196, 128, %s198, %s186
        $region32: #{tpu_custom_call.1} parent=27 // pred_fallthru
          _
      $region28: #{tpu_custom_call.1} parent=5 // pred_fallthru
        _
      %p201 = scmp.le.s32.totalorder 1, %s17
      %p202 = scmp.lt.s32.totalorder %s17, 3
      %p203 = pnand %p201, %p202
      %p204 = pneg %p203
      // Predicated region
      $region33: #{tpu_custom_call.1} parent=5 // pred_check
        _
      $region34: #{tpu_custom_call.1} parent=5 // pred_check_branch
        %206 = sbr.rel (%p203) target = $region36
      $region35: #{tpu_custom_call.1} parent=5 // pred_region
        %s207 = ssub.s32 %s17, 1
        %s208 = sand.u32 %s30, 1
        %s209 = scalar_lea.sflag [#allocation5], %s208
        %s210 = sand.u32 %s30, 1
        %s211 = smul.addr %s210, 8
        %s212 = scalar_lea.vmem [#allocation4], %s211
        // Predicated region
        $region37: #{tpu_custom_call.1} parent=35 // pred_check
          %p213 = pneg %p43
        $region38: #{tpu_custom_call.1} parent=35 // pred_check_branch
          %215 = sbr.rel (%p213) target = $region40
        $region39: #{tpu_custom_call.1} parent=35 // pred_region
          %217 = dma.done %s209, 128
        $region40: #{tpu_custom_call.1} parent=35 // pred_fallthru
          _
        // Predicated region
        $region41: #{tpu_custom_call.1} parent=35 // pred_check
          %p218 = pneg %p64
        $region42: #{tpu_custom_call.1} parent=35 // pred_check_branch
          %220 = sbr.rel (%p218) target = $region44
        $region43: #{tpu_custom_call.1} parent=35 // pred_region
          %222 = dma.done [#allocation8], 256
        $region44: #{tpu_custom_call.1} parent=35 // pred_fallthru
          _
        // Predicated region
        $region45: #{tpu_custom_call.1} parent=35 // pred_check
          %p223 = pneg %p85
        $region46: #{tpu_custom_call.1} parent=35 // pred_check_branch
          %225 = sbr.rel (%p223) target = $region48
        $region47: #{tpu_custom_call.1} parent=35 // pred_region
          %227 = dma.done [#allocation8], 256
        $region48: #{tpu_custom_call.1} parent=35 // pred_fallthru
          _
        %s228 = sand.u32 %s30, 1
        %s229 = scalar_lea.sflag [#allocation5], %s228
        %s230 = sand.u32 %s30, 1
        %s231 = smul.addr %s230, 8
        %s232 = scalar_lea.vmem [#allocation4], %s231
        %p233 = pneg %p43
        %p234 = pneg %p40
        %p235 = pneg %p64
        %p236 = pneg %p61
        %p237 = pneg %p85
        %p238 = pneg %p82
        %p239 = pneg %p106
        %p240 = pneg %p103
        %p241 = pneg %p132
        %p242 = pneg %p129
        %s243 = sand.u32 %s119, 1
        %s244 = scalar_lea.sflag [#allocation6], %s243
        %s245 = sand.u32 %s119, 1
        %s246 = smul.addr %s245, 8
        %s247 = scalar_lea.vmem [#allocation10], %s246
        %v249 = vld [vmem:[%s212] sm:$0xff]
        %v250 = vpack.c.bf16 %v249, %v249
        %v251 = vld [vmem:[#allocation7] sm:$0xf]
        %v252 = vld [vmem:[#allocation7 + $0x4] sm:$0xf]
        %v253 = vld [vmem:[#allocation7 + $0x8] sm:$0xf]
        %v254 = vld [vmem:[#allocation7 + $0xc] sm:$0xf]
        %v259 = vunpack.c.l.b16 %v251
        %v260 = vunpack.c.l.b16 %v252
        %v261 = vunpack.c.l.b16 %v253
        %v262 = vunpack.c.l.b16 %v254
        %v263 = vpack.c.b16 %v260, %v259
        %v264 = vpack.c.b16 %v262, %v261
        %vm267 = vcmask 261120
        %v269 = vsel %vm267, %v250, 0
        %271 = vmatpush.bf16.msra.mxu0 0
        %272 = vmatpush.bf16.msra.mxu0 0
        %273 = vmatpush.bf16.msra.mxu0 0
        %274 = vmatpush.bf16.msra.mxu0 0
        %275 = vmatpush.bf16.msra.mxu0 0
        %276 = vmatpush.bf16.msra.mxu0 0
        %277 = vmatpush.bf16.msra.mxu0 %v264
        %278 = vmatpush.bf16.msra.mxu0 %v263
        %279 = vmatmul.bf16.gmra.mxu0 %v269
        %v280 = vpop.f32.mrf.mxu0
        %v281 = vadd.f32 0.0, %v280
        %v282 = vpop.f32.mrf.mxu0
        %283 = vdwg.mxu0
        %v284 = vpack.c.bf16 %v281, %v281
        %vm285 = vcmask 781312
        %286 = vst.msk [vmem:[#allocation2] sm:$0xf] %vm285, %v284
        %v287 = vld [vmem:[#allocation2] sm:$0xf]
        %v289 = vunpack.c.l.b16 %v287
        %v290 = vpack.c.b16 %v289, %v289
        %291 = vrot.lane.b32.xlu0 %v290, 96
        %v292 = vpop.permute.xlu0 %291
        %vm293 = vcmask 31744
        %v295 = vsel %vm293, %v287, 0
        %v298 = vsel %vm293, %v292, 0
        %300 = vmatpush.bf16.xpose.msra.mxu0 0
        %301 = vmatpush.bf16.xpose.msra.mxu0 0
        %302 = vmatpush.bf16.xpose.msra.mxu0 0
        %303 = vmatpush.bf16.xpose.msra.mxu0 0
        %304 = vmatpush.bf16.xpose.msra.mxu0 0
        %305 = vmatpush.bf16.xpose.msra.mxu0 0
        %306 = vmatpush.bf16.xpose.msra.mxu0 0
        %307 = vmatpush.bf16.xpose.msra.mxu0 %v298
        %308 = vmatmul.bf16.gmra.mxu0 %v295
        %v309 = vpop.f32.mrf.mxu0
        %v310 = vadd.f32 0.0, %v309
        %v311 = vpop.f32.mrf.mxu0
        %312 = vdwg.mxu0
        %vm313 = vcmask 64512
        %v314 = vsel %vm313, %v310, -inf
        %315 = vmax.xlane.f32.xlu0 %v314
        %v316 = vpop.xlane.xlu0 %315
        %v317 = vsub.f32 %v310, %v316
        %v318 = vmul.f32 %v317, 1.442695
        %v319 = vpow.pop %v318
        %v320 = vsel %vm313, %v319, 0.0
        %321 = vadd.xlane.f32.xlu0 %v320
        %v322 = vpop.xlane.xlu0 %321
        %v323 = vrcp.pop %v322
        %v324 = vpack.c.bf16 %v319, %v319
        %325 = vrot.lane.b32.xlu0 %v290, 64
        %v326 = vpop.permute.xlu0 %325
        %v328 = vsel %vm313, %v324, 0
        %vm330 = vcmask 1043456
        %v332 = vsel %vm330, %v326, 0
        %334 = vmatpush.bf16.msra.mxu0 0
        %335 = vmatpush.bf16.msra.mxu0 0
        %336 = vmatpush.bf16.msra.mxu0 0
        %337 = vmatpush.bf16.msra.mxu0 0
        %338 = vmatpush.bf16.msra.mxu0 0
        %339 = vmatpush.bf16.msra.mxu0 0
        %340 = vmatpush.bf16.msra.mxu0 0
        %341 = vmatpush.bf16.msra.mxu0 %v332
        %342 = vmatmul.bf16.gmra.mxu0 %v328
        %v343 = vpop.f32.mrf.mxu0
        %v344 = vadd.f32 0.0, %v343
        %v345 = vpop.f32.mrf.mxu0
        %346 = vdwg.mxu0
        %v347 = vmul.f32 %v344, %v323
        %v348 = vpack.c.bf16 %v347, %v347
        %vm349 = vcmask 27648
        %350 = vst.msk [vmem:[#allocation3] sm:$0xf] %vm349, %v348
        %v351 = vld [vmem:[#allocation2] sm:$0xf]
        %v353 = vunpack.c.l.b16 %v351
        %v354 = vpack.c.b16 %v353, %v353
        %355 = vrot.lane.b32.xlu0 %v354, 124
        %v356 = vpop.permute.xlu0 %355
        %357 = vrot.lane.b32.xlu0 %v354, 92
        %v358 = vpop.permute.xlu0 %357
        %v360 = vsel %vm293, %v356, 0
        %v363 = vsel %vm293, %v358, 0
        %365 = vmatpush.bf16.xpose.msra.mxu0 0
        %366 = vmatpush.bf16.xpose.msra.mxu0 0
        %367 = vmatpush.bf16.xpose.msra.mxu0 0
        %368 = vmatpush.bf16.xpose.msra.mxu0 0
        %369 = vmatpush.bf16.xpose.msra.mxu0 0
        %370 = vmatpush.bf16.xpose.msra.mxu0 0
        %371 = vmatpush.bf16.xpose.msra.mxu0 0
        %372 = vmatpush.bf16.xpose.msra.mxu0 %v363
        %373 = vmatmul.bf16.gmra.mxu0 %v360
        %v374 = vpop.f32.mrf.mxu0
        %v375 = vadd.f32 0.0, %v374
        %v376 = vpop.f32.mrf.mxu0
        %377 = vdwg.mxu0
        %v378 = vsel %vm313, %v375, -inf
        %379 = vmax.xlane.f32.xlu0 %v378
        %v380 = vpop.xlane.xlu0 %379
        %v381 = vsub.f32 %v375, %v380
        %v382 = vmul.f32 %v381, 1.442695
        %v383 = vpow.pop %v382
        %v384 = vsel %vm313, %v383, 0.0
        %385 = vadd.xlane.f32.xlu0 %v384
        %v386 = vpop.xlane.xlu0 %385
        %v387 = vrcp.pop %v386
        %v388 = vpack.c.bf16 %v383, %v383
        %389 = vrot.lane.b32.xlu0 %v354, 60
        %v390 = vpop.permute.xlu0 %389
        %v392 = vsel %vm313, %v388, 0
        %v395 = vsel %vm330, %v390, 0
        %397 = vmatpush.bf16.msra.mxu0 0
        %398 = vmatpush.bf16.msra.mxu0 0
        %399 = vmatpush.bf16.msra.mxu0 0
        %400 = vmatpush.bf16.msra.mxu0 0
        %401 = vmatpush.bf16.msra.mxu0 0
        %402 = vmatpush.bf16.msra.mxu0 0
        %403 = vmatpush.bf16.msra.mxu0 0
        %404 = vmatpush.bf16.msra.mxu0 %v395
        %405 = vmatmul.bf16.gmra.mxu0 %v392
        %v406 = vpop.f32.mrf.mxu0
        %v407 = vadd.f32 0.0, %v406
        %v408 = vpop.f32.mrf.mxu0
        %409 = vdwg.mxu0
        %v410 = vmul.f32 %v407, %v387
        %v411 = vpack.c.bf16 %v410, %v410
        %413 = vrot.lane.b32.xlu0 %v411, 4
        %v414 = vpop.permute.xlu0 %413
        %vm416 = vcmask 60448
        %417 = vst.msk [vmem:[#allocation3] sm:$0xf] %vm416, %v414
        %v418 = vld [vmem:[#allocation2] sm:$0xf]
        %v420 = vunpack.c.l.b16 %v418
        %v421 = vpack.c.b16 %v420, %v420
        %422 = vrot.lane.b32.xlu0 %v421, 120
        %v423 = vpop.permute.xlu0 %422
        %424 = vrot.lane.b32.xlu0 %v421, 88
        %v425 = vpop.permute.xlu0 %424
        %v427 = vsel %vm293, %v423, 0
        %v430 = vsel %vm293, %v425, 0
        %432 = vmatpush.bf16.xpose.msra.mxu0 0
        %433 = vmatpush.bf16.xpose.msra.mxu0 0
        %434 = vmatpush.bf16.xpose.msra.mxu0 0
        %435 = vmatpush.bf16.xpose.msra.mxu0 0
        %436 = vmatpush.bf16.xpose.msra.mxu0 0
        %437 = vmatpush.bf16.xpose.msra.mxu0 0
        %438 = vmatpush.bf16.xpose.msra.mxu0 0
        %439 = vmatpush.bf16.xpose.msra.mxu0 %v430
        %440 = vmatmul.bf16.gmra.mxu0 %v427
        %v441 = vpop.f32.mrf.mxu0
        %v442 = vadd.f32 0.0, %v441
        %v443 = vpop.f32.mrf.mxu0
        %444 = vdwg.mxu0
        %v445 = vsel %vm313, %v442, -inf
        %446 = vmax.xlane.f32.xlu0 %v445
        %v447 = vpop.xlane.xlu0 %446
        %v448 = vsub.f32 %v442, %v447
        %v449 = vmul.f32 %v448, 1.442695
        %v450 = vpow.pop %v449
        %v451 = vsel %vm313, %v450, 0.0
        %452 = vadd.xlane.f32.xlu0 %v451
        %v453 = vpop.xlane.xlu0 %452
        %v454 = vrcp.pop %v453
        %v455 = vpack.c.bf16 %v450, %v450
        %456 = vrot.lane.b32.xlu0 %v421, 56
        %v457 = vpop.permute.xlu0 %456
        %v459 = vsel %vm313, %v455, 0
        %v462 = vsel %vm330, %v457, 0
        %464 = vmatpush.bf16.msra.mxu0 0
        %465 = vmatpush.bf16.msra.mxu0 0
        %466 = vmatpush.bf16.msra.mxu0 0
        %467 = vmatpush.bf16.msra.mxu0 0
        %468 = vmatpush.bf16.msra.mxu0 0
        %469 = vmatpush.bf16.msra.mxu0 0
        %470 = vmatpush.bf16.msra.mxu0 0
        %471 = vmatpush.bf16.msra.mxu0 %v462
        %472 = vmatmul.bf16.gmra.mxu0 %v459
        %v473 = vpop.f32.mrf.mxu0
        %v474 = vadd.f32 0.0, %v473
        %v475 = vpop.f32.mrf.mxu0
        %476 = vdwg.mxu0
        %v477 = vmul.f32 %v474, %v454
        %v478 = vpack.c.bf16 %v477, %v477
        %480 = vrot.lane.b32.xlu0 %v478, 8
        %v481 = vpop.permute.xlu0 %480
        %vm483 = vcmask 93248
        %484 = vst.msk [vmem:[#allocation3] sm:$0xf] %vm483, %v481
        %v485 = vld [vmem:[#allocation2] sm:$0xf]
        %v487 = vunpack.c.l.b16 %v485
        %v488 = vpack.c.b16 %v487, %v487
        %489 = vrot.lane.b32.xlu0 %v488, 116
        %v490 = vpop.permute.xlu0 %489
        %491 = vrot.lane.b32.xlu0 %v488, 84
        %v492 = vpop.permute.xlu0 %491
        %v494 = vsel %vm293, %v490, 0
        %v497 = vsel %vm293, %v492, 0
        %499 = vmatpush.bf16.xpose.msra.mxu0 0
        %500 = vmatpush.bf16.xpose.msra.mxu0 0
        %501 = vmatpush.bf16.xpose.msra.mxu0 0
        %502 = vmatpush.bf16.xpose.msra.mxu0 0
        %503 = vmatpush.bf16.xpose.msra.mxu0 0
        %504 = vmatpush.bf16.xpose.msra.mxu0 0
        %505 = vmatpush.bf16.xpose.msra.mxu0 0
        %506 = vmatpush.bf16.xpose.msra.mxu0 %v497
        %507 = vmatmul.bf16.gmra.mxu0 %v494
        %v508 = vpop.f32.mrf.mxu0
        %v509 = vadd.f32 0.0, %v508
        %v510 = vpop.f32.mrf.mxu0
        %511 = vdwg.mxu0
        %v512 = vsel %vm313, %v509, -inf
        %513 = vmax.xlane.f32.xlu0 %v512
        %v514 = vpop.xlane.xlu0 %513
        %v515 = vsub.f32 %v509, %v514
        %v516 = vmul.f32 %v515, 1.442695
        %v517 = vpow.pop %v516
        %v518 = vsel %vm313, %v517, 0.0
        %519 = vadd.xlane.f32.xlu0 %v518
        %v520 = vpop.xlane.xlu0 %519
        %v521 = vrcp.pop %v520
        %v522 = vpack.c.bf16 %v517, %v517
        %523 = vrot.lane.b32.xlu0 %v488, 52
        %v524 = vpop.permute.xlu0 %523
        %v526 = vsel %vm313, %v522, 0
        %v529 = vsel %vm330, %v524, 0
        %531 = vmatpush.bf16.msra.mxu0 0
        %532 = vmatpush.bf16.msra.mxu0 0
        %533 = vmatpush.bf16.msra.mxu0 0
        %534 = vmatpush.bf16.msra.mxu0 0
        %535 = vmatpush.bf16.msra.mxu0 0
        %536 = vmatpush.bf16.msra.mxu0 0
        %537 = vmatpush.bf16.msra.mxu0 0
        %538 = vmatpush.bf16.msra.mxu0 %v529
        %539 = vmatmul.bf16.gmra.mxu0 %v526
        %v540 = vpop.f32.mrf.mxu0
        %v541 = vadd.f32 0.0, %v540
        %v542 = vpop.f32.mrf.mxu0
        %543 = vdwg.mxu0
        %v544 = vmul.f32 %v541, %v521
        %v545 = vpack.c.bf16 %v544, %v544
        %547 = vrot.lane.b32.xlu0 %v545, 12
        %v548 = vpop.permute.xlu0 %547
        %vm550 = vcmask 126048
        %551 = vst.msk [vmem:[#allocation3] sm:$0xf] %vm550, %v548
        %v552 = vld [vmem:[#allocation2] sm:$0xf]
        %v554 = vunpack.c.l.b16 %v552
        %v555 = vpack.c.b16 %v554, %v554
        %556 = vrot.lane.b32.xlu0 %v555, 112
        %v557 = vpop.permute.xlu0 %556
        %558 = vrot.lane.b32.xlu0 %v555, 80
        %v559 = vpop.permute.xlu0 %558
        %v561 = vsel %vm293, %v557, 0
        %v564 = vsel %vm293, %v559, 0
        %566 = vmatpush.bf16.xpose.msra.mxu0 0
        %567 = vmatpush.bf16.xpose.msra.mxu0 0
        %568 = vmatpush.bf16.xpose.msra.mxu0 0
        %569 = vmatpush.bf16.xpose.msra.mxu0 0
        %570 = vmatpush.bf16.xpose.msra.mxu0 0
        %571 = vmatpush.bf16.xpose.msra.mxu0 0
        %572 = vmatpush.bf16.xpose.msra.mxu0 0
        %573 = vmatpush.bf16.xpose.msra.mxu0 %v564
        %574 = vmatmul.bf16.gmra.mxu0 %v561
        %v575 = vpop.f32.mrf.mxu0
        %v576 = vadd.f32 0.0, %v575
        %v577 = vpop.f32.mrf.mxu0
        %578 = vdwg.mxu0
        %v579 = vsel %vm313, %v576, -inf
        %580 = vmax.xlane.f32.xlu0 %v579
        %v581 = vpop.xlane.xlu0 %580
        %v582 = vsub.f32 %v576, %v581
        %v583 = vmul.f32 %v582, 1.442695
        %v584 = vpow.pop %v583
        %v585 = vsel %vm313, %v584, 0.0
        %586 = vadd.xlane.f32.xlu0 %v585
        %v587 = vpop.xlane.xlu0 %586
        %v588 = vrcp.pop %v587
        %v589 = vpack.c.bf16 %v584, %v584
        %590 = vrot.lane.b32.xlu0 %v555, 48
        %v591 = vpop.permute.xlu0 %590
        %v593 = vsel %vm313, %v589, 0
        %v596 = vsel %vm330, %v591, 0
        %598 = vmatpush.bf16.msra.mxu0 0
        %599 = vmatpush.bf16.msra.mxu0 0
        %600 = vmatpush.bf16.msra.mxu0 0
        %601 = vmatpush.bf16.msra.mxu0 0
        %602 = vmatpush.bf16.msra.mxu0 0
        %603 = vmatpush.bf16.msra.mxu0 0
        %604 = vmatpush.bf16.msra.mxu0 0
        %605 = vmatpush.bf16.msra.mxu0 %v596
        %606 = vmatmul.bf16.gmra.mxu0 %v593
        %v607 = vpop.f32.mrf.mxu0
        %v608 = vadd.f32 0.0, %v607
        %v609 = vpop.f32.mrf.mxu0
        %610 = vdwg.mxu0
        %v611 = vmul.f32 %v608, %v588
        %v612 = vpack.c.bf16 %v611, %v611
        %614 = vrot.lane.b32.xlu0 %v612, 16
        %v615 = vpop.permute.xlu0 %614
        %vm617 = vcmask 158848
        %618 = vst.msk [vmem:[#allocation3] sm:$0xf] %vm617, %v615
        %v619 = vld [vmem:[#allocation2] sm:$0xf]
        %v621 = vunpack.c.l.b16 %v619
        %v622 = vpack.c.b16 %v621, %v621
        %623 = vrot.lane.b32.xlu0 %v622, 108
        %v624 = vpop.permute.xlu0 %623
        %625 = vrot.lane.b32.xlu0 %v622, 76
        %v626 = vpop.permute.xlu0 %625
        %v628 = vsel %vm293, %v624, 0
        %v631 = vsel %vm293, %v626, 0
        %633 = vmatpush.bf16.xpose.msra.mxu0 0
        %634 = vmatpush.bf16.xpose.msra.mxu0 0
        %635 = vmatpush.bf16.xpose.msra.mxu0 0
        %636 = vmatpush.bf16.xpose.msra.mxu0 0
        %637 = vmatpush.bf16.xpose.msra.mxu0 0
        %638 = vmatpush.bf16.xpose.msra.mxu0 0
        %639 = vmatpush.bf16.xpose.msra.mxu0 0
        %640 = vmatpush.bf16.xpose.msra.mxu0 %v631
        %641 = vmatmul.bf16.gmra.mxu0 %v628
        %v642 = vpop.f32.mrf.mxu0
        %v643 = vadd.f32 0.0, %v642
        %v644 = vpop.f32.mrf.mxu0
        %645 = vdwg.mxu0
        %v646 = vsel %vm313, %v643, -inf
        %647 = vmax.xlane.f32.xlu0 %v646
        %v648 = vpop.xlane.xlu0 %647
        %v649 = vsub.f32 %v643, %v648
        %v650 = vmul.f32 %v649, 1.442695
        %v651 = vpow.pop %v650
        %v652 = vsel %vm313, %v651, 0.0
        %653 = vadd.xlane.f32.xlu0 %v652
        %v654 = vpop.xlane.xlu0 %653
        %v655 = vrcp.pop %v654
        %v656 = vpack.c.bf16 %v651, %v651
        %657 = vrot.lane.b32.xlu0 %v622, 44
        %v658 = vpop.permute.xlu0 %657
        %v660 = vsel %vm313, %v656, 0
        %v663 = vsel %vm330, %v658, 0
        %665 = vmatpush.bf16.msra.mxu0 0
        %666 = vmatpush.bf16.msra.mxu0 0
        %667 = vmatpush.bf16.msra.mxu0 0
        %668 = vmatpush.bf16.msra.mxu0 0
        %669 = vmatpush.bf16.msra.mxu0 0
        %670 = vmatpush.bf16.msra.mxu0 0
        %671 = vmatpush.bf16.msra.mxu0 0
        %672 = vmatpush.bf16.msra.mxu0 %v663
        %673 = vmatmul.bf16.gmra.mxu0 %v660
        %v674 = vpop.f32.mrf.mxu0
        %v675 = vadd.f32 0.0, %v674
        %v676 = vpop.f32.mrf.mxu0
        %677 = vdwg.mxu0
        %v678 = vmul.f32 %v675, %v655
        %v679 = vpack.c.bf16 %v678, %v678
        %681 = vrot.lane.b32.xlu0 %v679, 20
        %v682 = vpop.permute.xlu0 %681
        %vm684 = vcmask 191648
        %685 = vst.msk [vmem:[#allocation3] sm:$0xf] %vm684, %v682
        %v686 = vld [vmem:[#allocation2] sm:$0xf]
        %v688 = vunpack.c.l.b16 %v686
        %v689 = vpack.c.b16 %v688, %v688
        %690 = vrot.lane.b32.xlu0 %v689, 104
        %v691 = vpop.permute.xlu0 %690
        %692 = vrot.lane.b32.xlu0 %v689, 72
        %v693 = vpop.permute.xlu0 %692
        %v695 = vsel %vm293, %v691, 0
        %v698 = vsel %vm293, %v693, 0
        %700 = vmatpush.bf16.xpose.msra.mxu0 0
        %701 = vmatpush.bf16.xpose.msra.mxu0 0
        %702 = vmatpush.bf16.xpose.msra.mxu0 0
        %703 = vmatpush.bf16.xpose.msra.mxu0 0
        %704 = vmatpush.bf16.xpose.msra.mxu0 0
        %705 = vmatpush.bf16.xpose.msra.mxu0 0
        %706 = vmatpush.bf16.xpose.msra.mxu0 0
        %707 = vmatpush.bf16.xpose.msra.mxu0 %v698
        %708 = vmatmul.bf16.gmra.mxu0 %v695
        %v709 = vpop.f32.mrf.mxu0
        %v710 = vadd.f32 0.0, %v709
        %v711 = vpop.f32.mrf.mxu0
        %712 = vdwg.mxu0
        %v713 = vsel %vm313, %v710, -inf
        %714 = vmax.xlane.f32.xlu0 %v713
        %v715 = vpop.xlane.xlu0 %714
        %v716 = vsub.f32 %v710, %v715
        %v717 = vmul.f32 %v716, 1.442695
        %v718 = vpow.pop %v717
        %v719 = vsel %vm313, %v718, 0.0
        %720 = vadd.xlane.f32.xlu0 %v719
        %v721 = vpop.xlane.xlu0 %720
        %v722 = vrcp.pop %v721
        %v723 = vpack.c.bf16 %v718, %v718
        %724 = vrot.lane.b32.xlu0 %v689, 40
        %v725 = vpop.permute.xlu0 %724
        %v727 = vsel %vm313, %v723, 0
        %v730 = vsel %vm330, %v725, 0
        %732 = vmatpush.bf16.msra.mxu0 0
        %733 = vmatpush.bf16.msra.mxu0 0
        %734 = vmatpush.bf16.msra.mxu0 0
        %735 = vmatpush.bf16.msra.mxu0 0
        %736 = vmatpush.bf16.msra.mxu0 0
        %737 = vmatpush.bf16.msra.mxu0 0
        %738 = vmatpush.bf16.msra.mxu0 0
        %739 = vmatpush.bf16.msra.mxu0 %v730
        %740 = vmatmul.bf16.gmra.mxu0 %v727
        %v741 = vpop.f32.mrf.mxu0
        %v742 = vadd.f32 0.0, %v741
        %v743 = vpop.f32.mrf.mxu0
        %744 = vdwg.mxu0
        %v745 = vmul.f32 %v742, %v722
        %v746 = vpack.c.bf16 %v745, %v745
        %748 = vrot.lane.b32.xlu0 %v746, 24
        %v749 = vpop.permute.xlu0 %748
        %vm751 = vcmask 224448
        %752 = vst.msk [vmem:[#allocation3] sm:$0xf] %vm751, %v749
        %v753 = vld [vmem:[#allocation2] sm:$0xf]
        %v755 = vunpack.c.l.b16 %v753
        %v756 = vpack.c.b16 %v755, %v755
        %757 = vrot.lane.b32.xlu0 %v756, 100
        %v758 = vpop.permute.xlu0 %757
        %759 = vrot.lane.b32.xlu0 %v756, 68
        %v760 = vpop.permute.xlu0 %759
        %v762 = vsel %vm293, %v758, 0
        %v765 = vsel %vm293, %v760, 0
        %767 = vmatpush.bf16.xpose.msra.mxu0 0
        %768 = vmatpush.bf16.xpose.msra.mxu0 0
        %769 = vmatpush.bf16.xpose.msra.mxu0 0
        %770 = vmatpush.bf16.xpose.msra.mxu0 0
        %771 = vmatpush.bf16.xpose.msra.mxu0 0
        %772 = vmatpush.bf16.xpose.msra.mxu0 0
        %773 = vmatpush.bf16.xpose.msra.mxu0 0
        %774 = vmatpush.bf16.xpose.msra.mxu0 %v765
        %775 = vmatmul.bf16.gmra.mxu0 %v762
        %v776 = vpop.f32.mrf.mxu0
        %v777 = vadd.f32 0.0, %v776
        %v778 = vpop.f32.mrf.mxu0
        %779 = vdwg.mxu0
        %v780 = vsel %vm313, %v777, -inf
        %781 = vmax.xlane.f32.xlu0 %v780
        %v782 = vpop.xlane.xlu0 %781
        %v783 = vsub.f32 %v777, %v782
        %v784 = vmul.f32 %v783, 1.442695
        %v785 = vpow.pop %v784
        %v786 = vsel %vm313, %v785, 0.0
        %787 = vadd.xlane.f32.xlu0 %v786
        %v788 = vpop.xlane.xlu0 %787
        %v789 = vrcp.pop %v788
        %v790 = vpack.c.bf16 %v785, %v785
        %791 = vrot.lane.b32.xlu0 %v756, 36
        %v792 = vpop.permute.xlu0 %791
        %v794 = vsel %vm313, %v790, 0
        %v797 = vsel %vm330, %v792, 0
        %799 = vmatpush.bf16.msra.mxu0 0
        %800 = vmatpush.bf16.msra.mxu0 0
        %801 = vmatpush.bf16.msra.mxu0 0
        %802 = vmatpush.bf16.msra.mxu0 0
        %803 = vmatpush.bf16.msra.mxu0 0
        %804 = vmatpush.bf16.msra.mxu0 0
        %805 = vmatpush.bf16.msra.mxu0 0
        %806 = vmatpush.bf16.msra.mxu0 %v797
        %807 = vmatmul.bf16.gmra.mxu0 %v794
        %v808 = vpop.f32.mrf.mxu0
        %v809 = vadd.f32 0.0, %v808
        %v810 = vpop.f32.mrf.mxu0
        %811 = vdwg.mxu0
        %v812 = vmul.f32 %v809, %v789
        %v813 = vpack.c.bf16 %v812, %v812
        %815 = vrot.lane.b32.xlu0 %v813, 28
        %v816 = vpop.permute.xlu0 %815
        %vm818 = vcmask 257248
        %819 = vst.msk [vmem:[#allocation3] sm:$0xf] %vm818, %v816
        %v820 = vld [vmem:[#allocation3] sm:$0xf]
        %v821 = vld [vmem:[#allocation9] sm:$0xf]
        %v822 = vld [vmem:[#allocation9 + $0x4] sm:$0xf]
        %v823 = vld [vmem:[#allocation9 + $0x8] sm:$0xf]
        %v824 = vld [vmem:[#allocation9 + $0xc] sm:$0xf]
        %v825 = vld [vmem:[%s3] sm:$0x1]
        %v827 = vperm.slane %v825, 0
        %v833 = vunpack.c.l.b16 %v821
        %v834 = vunpack.c.l.b16 %v822
        %v835 = vunpack.c.l.b16 %v823
        %v836 = vunpack.c.l.b16 %v824
        %v837 = vpack.c.b16 %v834, %v833
        %v838 = vpack.c.b16 %v836, %v835
        %v842 = vsel %vm267, %v820, 0
        %844 = vmatpush.bf16.msra.mxu0 0
        %845 = vmatpush.bf16.msra.mxu0 0
        %846 = vmatpush.bf16.msra.mxu0 0
        %847 = vmatpush.bf16.msra.mxu0 0
        %848 = vmatpush.bf16.msra.mxu0 0
        %849 = vmatpush.bf16.msra.mxu0 0
        %850 = vmatpush.bf16.msra.mxu0 %v838
        %851 = vmatpush.bf16.msra.mxu0 %v837
        %852 = vmatmul.bf16.gmra.mxu0 %v842
        %v853 = vpop.f32.mrf.mxu0
        %v854 = vadd.f32 %v827, %v853
        %v855 = vpop.f32.mrf.mxu0
        %856 = vdwg.mxu0
        %857 = vst.msk [vmem:[%s247] sm:$0xff] %vm267, %v854
        %s858 = sand.u32 %s119, 1
        %s859 = scalar_lea.sflag [#allocation6], %s858
        %s860 = sand.u32 %s119, 1
        %s861 = smul.addr %s860, 8
        %s862 = scalar_lea.vmem [#allocation10], %s861
        // Predicated region
        $region49: #{tpu_custom_call.1} parent=35 // pred_check
          %p863 = pneg %p129
        $region50: #{tpu_custom_call.1} parent=35 // pred_check_branch
          %865 = sbr.rel (%p863) target = $region52
        $region51: #{tpu_custom_call.1} parent=35 // pred_region
          %867 = vsyncadd %s859, 0
          %s868 = smul.addr %s22, 8
          %s869 = scalar_lea.hbm %s4, %s868
          %s871 = sshll.u32 %s862, 4
          %s872 = int_to_ptr.vmem [resolvable:$true] %s871
          %s873 = sshll.u32 %s869, 4
          %s874 = int_to_ptr.hbm [resolvable:$true] %s873
          %876 = dma.vmem_to_hbm [thread:$0]  %s872, 128, %s874, %s859
        $region52: #{tpu_custom_call.1} parent=35 // pred_fallthru
          _
      $region36: #{tpu_custom_call.1} parent=5 // pred_fallthru
        _
      %p877 = scmp.le.s32.totalorder 2, %s17
      // Predicated region
      $region53: #{tpu_custom_call.1} parent=5 // pred_check
        %p878 = pneg %p877
      $region54: #{tpu_custom_call.1} parent=5 // pred_check_branch
        %880 = sbr.rel (%p878) target = $region56
      $region55: #{tpu_custom_call.1} parent=5 // pred_region
        %s881 = ssub.s32 %s17, 2
        // Predicated region
        $region57: #{tpu_custom_call.1} parent=55 // pred_check
          %p882 = pneg %p135
        $region58: #{tpu_custom_call.1} parent=55 // pred_check_branch
          %884 = sbr.rel (%p882) target = $region60
        $region59: #{tpu_custom_call.1} parent=55 // pred_region
          %s885 = sand.u32 %s120, 1
          %s886 = scalar_lea.sflag [#allocation6], %s885
          %s887 = sand.u32 %s120, 1
          %s888 = smul.addr %s887, 8
          %s889 = scalar_lea.vmem [#allocation10], %s888
          %891 = dma.done %s886, 128
        $region60: #{tpu_custom_call.1} parent=55 // pred_fallthru
          _
      $region56: #{tpu_custom_call.1} parent=5 // pred_fallthru
        _
    $region6: #{tpu_custom_call.1} parent=1 // loop_footer
      %s21 = sadd.s32 1, %s17
    $region7: #{tpu_custom_call.1} parent=1 // loop_footer_branch
      %16 = sbr.rel target = $region3
    $region8: #{tpu_custom_call.1} parent=1 // loop_exit
      _
    %892 = vsyncpa [#allocation5], 1
    %s893 = scalar_lea.sflag [#allocation5], 1
    %894 = vsyncpa %s893, 1
    %895 = vsyncpa [#allocation8], 1
    %896 = vsyncpa [#allocation6], 1
    %s897 = scalar_lea.sflag [#allocation6], 1
    %898 = vsyncpa %s897, 1

</llo_original>
